<compile_context>
chip_gen: v5e
topology: v5e:2x2
jax: 0.10.0
libtpu: 0.0.40
codegen_flags: <defaults>
</compile_context>

<pallas_src>
import jax
import jax.numpy as jnp
from jax.experimental import pallas as pl
from jax.experimental.pallas import tpu as pltpu


def _silu_from_preact(y):
    # SiLU(y) = y * sigmoid(y).  exp() and the approximate reciprocal go to
    # the EUP; one Newton-Raphson step makes the reciprocal ~f32-exact so the
    # result matches the PyTorch module (fixes the previous tolerance miss).
    d = 1.0 + jnp.exp(-y)
    r = pl.reciprocal(d, approx=True)
    r = r * (2.0 - d * r)
    return y * r


def _conv_bn_silu_kernel(w_ref, shift_ref, x_ref, o_ref):
    # w_ref:     (C2, C1)       BN-scale-folded 1x1 conv weight
    # shift_ref: (C2, 1)        beta - running_mean * scale      (f32)
    # x_ref:     (1, C1, t_hw)  one image's channels x spatial tile
    # o_ref:     (1, C2, t_hw)  lane-dense output tile
    y = jnp.dot(w_ref[...], x_ref[0], preferred_element_type=jnp.float32)
    y = y + shift_ref[...]
    o_ref[0] = _silu_from_preact(y).astype(o_ref.dtype)


def _conv_bn_silu_ksplit_kernel(w_ref, shift_ref, x_ref, o_ref, acc_ref):
    # Same computation with the C1 contraction split over grid axis 2;
    # the f32 accumulator lives in VMEM scratch and the BN/SiLU epilogue runs
    # once per output tile.
    k = pl.program_id(2)

    @pl.when(k == 0)
    def _():
        acc_ref[...] = jnp.zeros_like(acc_ref)

    acc_ref[...] += jnp.dot(w_ref[...], x_ref[0],
                            preferred_element_type=jnp.float32)

    @pl.when(k == pl.num_programs(2) - 1)
    def _():
        y = acc_ref[...] + shift_ref[...]
        o_ref[0] = _silu_from_preact(y).astype(o_ref.dtype)


def _vmem_budget_bytes():
    # Conservative default that is safe on every generation (v7x: 64 MiB per
    # TensorCore); raised when the hardware reports more (v5e/v6e: 128 MiB).
    cap = 56 * 2**20
    try:
        reported = int(pltpu.get_tpu_info().vmem_capacity_bytes)
        cap = min(100 * 2**20, max(cap, reported - 8 * 2**20))
    except Exception:  # interpret mode / non-TPU backend / missing API
        pass
    return cap


def conv_bn_silu(x_nchw, w_oihw, gamma, beta, running_mean, running_var,
                 eps=1e-5, t_hw=None, tk=None, out_dtype=None):
    """Forward of Conv(c1, c2, k=1): SiLU(BN(Conv2d_1x1(x))), NCHW in/out.

    Inference (running-stats) BatchNorm semantics, i.e. module.eval().
    """
    N, C1, H, W = x_nchw.shape
    C2 = w_oihw.shape[0]
    HW = H * W
    x_dtype = x_nchw.dtype
    if out_dtype is None:
        out_dtype = x_dtype
    in_isz = jnp.dtype(x_dtype).itemsize
    out_isz = jnp.dtype(out_dtype).itemsize

    # ---- fold BN (inference) scale into the weight; only the shift survives.
    scale = (gamma.astype(jnp.float32)
             / jnp.sqrt(running_var.astype(jnp.float32) + eps))        # (C2,)
    w2d = w_oihw.reshape(C2, C1).astype(jnp.float32) * scale[:, None]
    shift = (beta.astype(jnp.float32)
             - running_mean.astype(jnp.float32) * scale).reshape(C2, 1)
    # Weights are tiny and VMEM-resident: match the activation dtype so the
    # MXU sees a homogeneous matmul (bf16 x bf16 when activations are bf16).
    w2d = w2d.astype(x_dtype)

    # ---- free view: NCHW -> (N, C1, HW).  NO pad, NO cast (each would be a
    #      full extra HBM pass of a memory-bound op).
    x3d = x_nchw.reshape(N, C1, HW)

    # ---- contraction (C1) split: only for very wide layers.
    if tk is None:
        tk = C1
        wide = 2048 if in_isz <= 2 else 1024
        if C1 > wide:
            tk = 512 if in_isz <= 2 else 256
    tk = int(tk)
    if tk <= 0 or tk >= C1 or C1 % tk != 0 or tk % 128 != 0:
        tk = C1          # no split (ragged contraction tiles are not allowed)
    num_k = C1 // tk

    # ---- spatial (lane) tile: sized from the VMEM budget, 512-lane aligned.
    hw_full = pl.cdiv(HW, 128) * 128
    vmem_cap = _vmem_budget_bytes()
    budget = vmem_cap * 3 // 4                    # headroom for Mosaic scratch
    per_lane_db = (2 * tk * in_isz + 2 * C2 * out_isz
                   + (4 * C2 if num_k > 1 else 0))
    w_bytes = (2 if num_k > 1 else 1) * C2 * tk * in_isz + 8 * C2
    t_max = max(128, (budget - w_bytes) // per_lane_db)
    # Target ~4 MiB of fresh bytes (x in + out) per grid step: amortizes the
    # ~0.35 us per-step overhead and keeps DMA bursts long / stores unmasked.
    per_lane_step = tk * in_isz + C2 * out_isz
    t_target = max(512, (4 * 2**20) // max(1, per_lane_step))
    t_cur = min(int(t_hw), t_max) if t_hw is not None else min(t_target, t_max)
    if t_cur >= 512:
        t_cur = (t_cur // 512) * 512   # 2x256 MXU (v6e/v7x) and 4x128 (v5e)
    else:
        t_cur = (t_cur // 128) * 128
    t_hw = max(128, min(t_cur, hw_full))
    num_hw = pl.cdiv(HW, t_hw)

    # ---- VMEM limit: actual working set + slack, capped per generation.
    est = (2 * tk * t_hw * in_isz            # double-buffered x tiles
           + 2 * C2 * t_hw * out_isz         # double-buffered out tiles
           + w_bytes                         # weights + shift
           + (4 * C2 * t_hw if num_k > 1 else 0))   # f32 accumulator
    vmem_limit = int(min(vmem_cap, max(32 * 2**20, 2 * est)))

    def run(single_buffer_consts):
        # Grid-invariant weight/shift: double-buffering buys nothing.
        const_kw = ({"pipeline_mode": pl.Buffered(1)}
                    if single_buffer_consts else {})
        if num_k == 1:
            grid = (num_hw, N)
            in_specs = [
                pl.BlockSpec((C2, C1), lambda j, n: (0, 0), **const_kw),
                pl.BlockSpec((C2, 1), lambda j, n: (0, 0), **const_kw),
                pl.BlockSpec((1, C1, t_hw), lambda j, n: (n, 0, j)),
            ]
            out_specs = pl.BlockSpec((1, C2, t_hw), lambda j, n: (n, 0, j))
            kernel = _conv_bn_silu_kernel
            scratch = []
            semantics = ("parallel", "parallel")
        else:
            grid = (num_hw, N, num_k)
            in_specs = [
                pl.BlockSpec((C2, tk), lambda j, n, k: (0, k)),
                pl.BlockSpec((C2, 1), lambda j, n, k: (0, 0), **const_kw),
                pl.BlockSpec((1, tk, t_hw), lambda j, n, k: (n, k, j)),
            ]
            out_specs = pl.BlockSpec((1, C2, t_hw), lambda j, n, k: (n, 0, j))
            kernel = _conv_bn_silu_ksplit_kernel
            scratch = [pltpu.VMEM((C2, t_hw), jnp.float32)]
            semantics = ("parallel", "parallel", "arbitrary")
        return pl.pallas_call(
            kernel,
            out_shape=jax.ShapeDtypeStruct((N, C2, HW), out_dtype),
            grid_spec=pltpu.PrefetchScalarGridSpec(
                num_scalar_prefetch=0,
                grid=grid,
                in_specs=in_specs,
                out_specs=out_specs,
                scratch_shapes=scratch),
            compiler_params=pltpu.CompilerParams(
                dimension_semantics=semantics,
                vmem_limit_bytes=vmem_limit),
        )(w2d, shift, x3d)

    try:
        out3d = run(single_buffer_consts=True)
    except Exception:
        # Builds that reject pipeline_mode=Buffered(1) fall back to defaults.
        out3d = run(single_buffer_consts=False)

    # Free reshape back to NCHW (no slicing pass: out_shape already (N,C2,HW)).
    return out3d.reshape(N, C2, H, W)


def _reference(x, w, gamma, beta, mean, var, eps=1e-5):
    C2 = w.shape[0]
    y = jnp.einsum("nchw,oc->nohw", x.astype(jnp.float32),
                   w.reshape(C2, -1).astype(jnp.float32),
                   precision="highest")
    inv = gamma / jnp.sqrt(var + eps)
    y = ((y - mean[None, :, None, None]) * inv[None, :, None, None]
         + beta[None, :, None, None])
    return y * jax.nn.sigmoid(y)


if __name__ == "__main__":
    key = jax.random.PRNGKey(0)

    def make_inputs(k, N, C1, C2, H, W, w_scale):
        ks = jax.random.split(k, 6)
        x = jax.random.normal(ks[0], (N, C1, H, W), dtype=jnp.float32)
        w = jax.random.normal(ks[1], (C2, C1, 1, 1), dtype=jnp.float32) * w_scale
        gamma = 1.0 + 0.1 * jax.random.normal(ks[2], (C2,), dtype=jnp.float32)
        beta = 0.1 * jax.random.normal(ks[3], (C2,), dtype=jnp.float32)
        mean = 0.1 * jax.random.normal(ks[4], (C2,), dtype=jnp.float32)
        var = jnp.abs(jax.random.normal(ks[5], (C2,), dtype=jnp.float32)) + 0.5
        return x, w, gamma, beta, mean, var

    k1, k2, k3 = jax.random.split(key, 3)

    # 1) Main test: small shapes matching the module (1x1 conv, no bias).
    x, w, gamma, beta, mean, var = make_inputs(k1, 2, 4, 8, 16, 16, 0.1)
    out = conv_bn_silu(x, w, gamma, beta, mean, var)
    jax.block_until_ready(out)
    ref = _reference(x, w, gamma, beta, mean, var)
    assert out.shape == (2, 8, 16, 16)
    assert jnp.max(jnp.abs(out - ref)) < 1e-2

    # 2) Wide-layer path: forced K-split (accumulator + epilogue kernel).
    x2, w2, g2, b2, m2, v2 = make_inputs(k2, 1, 256, 32, 16, 16, 0.05)
    out2 = conv_bn_silu(x2, w2, g2, b2, m2, v2, tk=128)
    jax.block_until_ready(out2)
    ref2 = _reference(x2, w2, g2, b2, m2, v2)
    assert out2.shape == (1, 32, 16, 16)
    assert jnp.max(jnp.abs(out2 - ref2)) < 2e-2

    # 3) Ragged spatial extent: HW=144 with 128-lane tiles exercises the
    #    pad-free boundary-masked path (no jnp.pad, no output slice).
    x3, w3, g3, b3, m3, v3 = make_inputs(k3, 1, 4, 8, 12, 12, 0.1)
    out3 = conv_bn_silu(x3, w3, g3, b3, m3, v3, t_hw=128)
    jax.block_until_ready(out3)
    ref3 = _reference(x3, w3, g3, b3, m3, v3)
    assert out3.shape == (1, 8, 12, 12)
    assert jnp.max(jnp.abs(out3 - ref3)) < 1e-2

    # 4) bf16 activations in / bf16 out (halved HBM streams when the
    #    surrounding network already runs in bf16) — loose tolerance.
    out4 = conv_bn_silu(x.astype(jnp.bfloat16), w, gamma, beta, mean, var)
    jax.block_until_ready(out4)
    assert out4.dtype == jnp.bfloat16
    assert jnp.max(jnp.abs(out4.astype(jnp.float32) - ref)) < 5e-2

    print("KERNEL_OK")
</pallas_src>

<mosaic_0001>
module attributes {stable_mosaic.version = 11 : i64} {
  func.func @_conv_bn_silu_kernel(%arg0: i32, %arg1: i32, %arg2: memref<8x4xf32, #tpu.memory_space<vmem>>, %arg3: memref<8x1xf32, #tpu.memory_space<vmem>>, %arg4: memref<1x4x256xf32, #tpu.memory_space<vmem>>, %arg5: memref<1x8x256xf32, #tpu.memory_space<vmem>>) attributes {dimension_semantics = [#tpu.dimension_semantics<parallel>, #tpu.dimension_semantics<parallel>], iteration_bounds = array<i64: 1, 2>, scalar_prefetch = 0 : i64, scratch_operands = 0 : i64, tpu.core_type = #tpu.core_type<tc>, window_params = [{pipeline_mode = #tpu.pipeline_mode<synchronous>, transform_indices = @transform_0, window_bounds = array<i64: 8, 4>}, {pipeline_mode = #tpu.pipeline_mode<synchronous>, transform_indices = @transform_1, window_bounds = array<i64: 8, 1>}, {transform_indices = @transform_2, window_bounds = array<i64: 1, 4, 256>}, {transform_indices = @transform_3, window_bounds = array<i64: 1, 8, 256>}]} {
    %c0 = arith.constant 0 : index
    %c0_0 = arith.constant 0 : index
    %0 = vector.load %arg2[%c0, %c0_0] : memref<8x4xf32, #tpu.memory_space<vmem>>, vector<8x4xf32>
    %c0_1 = arith.constant 0 : index
    %c0_2 = arith.constant 0 : index
    %c0_3 = arith.constant 0 : index
    %1 = vector.load %arg4[%c0_1, %c0_2, %c0_3] : memref<1x4x256xf32, #tpu.memory_space<vmem>>, vector<1x4x256xf32>
    %2 = vector.shape_cast %1 : vector<1x4x256xf32> to vector<4x256xf32>
    %cst = arith.constant dense<0.000000e+00> : vector<8x256xf32>
    %3 = tpu.matmul %0, %2, %cst {dimension_numbers = #tpu.dot_dimension_numbers<[1], [0], [0], [1], [0, 0, 1, 1], [], []>} : vector<8x4xf32>, vector<4x256xf32>, vector<8x256xf32> -> vector<8x256xf32>
    %c0_4 = arith.constant 0 : index
    %c0_5 = arith.constant 0 : index
    %4 = vector.load %arg3[%c0_4, %c0_5] : memref<8x1xf32, #tpu.memory_space<vmem>>, vector<8x1xf32>
    %5 = vector.broadcast %4 : vector<8x1xf32> to vector<8x256xf32>
    %6 = arith.addf %3, %5 : vector<8x256xf32>
    %cst_6 = arith.constant 0.000000e+00 : f32
    %7 = vector.broadcast %cst_6 : f32 to vector<8x256xf32>
    %8 = arith.subf %7, %6 : vector<8x256xf32>
    %9 = math.exp %8 : vector<8x256xf32>
    %cst_7 = arith.constant 1.000000e+00 : f32
    %10 = vector.broadcast %cst_7 : f32 to vector<8x256xf32>
    %11 = arith.addf %10, %9 : vector<8x256xf32>
    %12 = tpu.reciprocal %11 {approx = true} : vector<8x256xf32> -> vector<8x256xf32>
    %13 = arith.mulf %11, %12 : vector<8x256xf32>
    %cst_8 = arith.constant 2.000000e+00 : f32
    %14 = vector.broadcast %cst_8 : f32 to vector<8x256xf32>
    %15 = arith.subf %14, %13 : vector<8x256xf32>
    %16 = arith.mulf %12, %15 : vector<8x256xf32>
    %17 = arith.mulf %6, %16 : vector<8x256xf32>
    %c0_9 = arith.constant 0 : index
    %c0_10 = arith.constant 0 : index
    %c0_11 = arith.constant 0 : index
    %18 = vector.load %arg5[%c0_9, %c0_10, %c0_11] : memref<1x8x256xf32, #tpu.memory_space<vmem>>, vector<1x8x256xf32>
    %19 = vector.shape_cast %18 : vector<1x8x256xf32> to vector<8x256xf32>
    %20 = vector.shape_cast %17 : vector<8x256xf32> to vector<1x8x256xf32>
    tpu.vector_store %arg5[%c0_9, %c0_10, %c0_11], %20 {strides = array<i32>} : memref<1x8x256xf32, #tpu.memory_space<vmem>>, vector<1x8x256xf32>,
    return
  }
  func.func @transform_0(%arg0: i32, %arg1: i32) -> (i32, i32) {
    %c0_i32 = arith.constant 0 : i32
    %c0_i32_0 = arith.constant 0 : i32
    %c0_i32_1 = arith.constant 0 : i32
    return %c0_i32, %c0_i32_0 : i32, i32
  }
  func.func @transform_1(%arg0: i32, %arg1: i32) -> (i32, i32) {
    %c0_i32 = arith.constant 0 : i32
    %c0_i32_0 = arith.constant 0 : i32
    %c0_i32_1 = arith.constant 0 : i32
    return %c0_i32, %c0_i32_0 : i32, i32
  }
  func.func @transform_2(%arg0: i32, %arg1: i32) -> (i32, i32, i32) {
    %c0_i32 = arith.constant 0 : i32
    %c0_i32_0 = arith.constant 0 : i32
    return %arg1, %c0_i32, %arg0 : i32, i32, i32
  }
  func.func @transform_3(%arg0: i32, %arg1: i32) -> (i32, i32, i32) {
    %c0_i32 = arith.constant 0 : i32
    %c0_i32_0 = arith.constant 0 : i32
    return %arg1, %c0_i32, %arg0 : i32, i32, i32
  }
}

module attributes {stable_mosaic.version = 11 : i64} {
  func.func @_conv_bn_silu_kernel(%arg0: i32, %arg1: i32, %arg2: memref<8x4xf32, #tpu.memory_space<vmem>>, %arg3: memref<8x1xf32, #tpu.memory_space<vmem>>, %arg4: memref<1x4x256xf32, #tpu.memory_space<vmem>>, %arg5: memref<1x8x256xf32, #tpu.memory_space<vmem>>) attributes {dimension_semantics = [#tpu.dimension_semantics<parallel>, #tpu.dimension_semantics<parallel>], iteration_bounds = array<i64: 1, 2>, scalar_prefetch = 0 : i64, scratch_operands = 0 : i64, tpu.core_type = #tpu.core_type<tc>, window_params = [{pipeline_mode = #tpu.pipeline_mode<synchronous>, transform_indices = @transform_0, window_bounds = array<i64: 8, 4>}, {pipeline_mode = #tpu.pipeline_mode<synchronous>, transform_indices = @transform_1, window_bounds = array<i64: 8, 1>}, {transform_indices = @transform_2, window_bounds = array<i64: 1, 4, 256>}, {transform_indices = @transform_3, window_bounds = array<i64: 1, 8, 256>}]} {
    %c0 = arith.constant 0 : index
    %c0_0 = arith.constant 0 : index
    %0 = vector.load %arg2[%c0, %c0_0] : memref<8x4xf32, #tpu.memory_space<vmem>>, vector<8x4xf32>
    %c0_1 = arith.constant 0 : index
    %c0_2 = arith.constant 0 : index
    %c0_3 = arith.constant 0 : index
    %1 = vector.load %arg4[%c0_1, %c0_2, %c0_3] : memref<1x4x256xf32, #tpu.memory_space<vmem>>, vector<1x4x256xf32>
    %2 = vector.shape_cast %1 : vector<1x4x256xf32> to vector<4x256xf32>
    %cst = arith.constant dense<0.000000e+00> : vector<8x256xf32>
    %3 = tpu.matmul %0, %2, %cst {dimension_numbers = #tpu.dot_dimension_numbers<[1], [0], [0], [1], [0, 0, 1, 1], [], []>} : vector<8x4xf32>, vector<4x256xf32>, vector<8x256xf32> -> vector<8x256xf32>
    %c0_4 = arith.constant 0 : index
    %c0_5 = arith.constant 0 : index
    %4 = vector.load %arg3[%c0_4, %c0_5] : memref<8x1xf32, #tpu.memory_space<vmem>>, vector<8x1xf32>
    %5 = vector.broadcast %4 : vector<8x1xf32> to vector<8x256xf32>
    %6 = arith.addf %3, %5 : vector<8x256xf32>
    %cst_6 = arith.constant 0.000000e+00 : f32
    %7 = vector.broadcast %cst_6 : f32 to vector<8x256xf32>
    %8 = arith.subf %7, %6 : vector<8x256xf32>
    %9 = math.exp %8 : vector<8x256xf32>
    %cst_7 = arith.constant 1.000000e+00 : f32
    %10 = vector.broadcast %cst_7 : f32 to vector<8x256xf32>
    %11 = arith.addf %10, %9 : vector<8x256xf32>
    %12 = tpu.reciprocal %11 {approx = true} : vector<8x256xf32> -> vector<8x256xf32>
    %13 = arith.mulf %11, %12 : vector<8x256xf32>
    %cst_8 = arith.constant 2.000000e+00 : f32
    %14 = vector.broadcast %cst_8 : f32 to vector<8x256xf32>
    %15 = arith.subf %14, %13 : vector<8x256xf32>
    %16 = arith.mulf %12, %15 : vector<8x256xf32>
    %17 = arith.mulf %6, %16 : vector<8x256xf32>
    %c0_9 = arith.constant 0 : index
    %c0_10 = arith.constant 0 : index
    %c0_11 = arith.constant 0 : index
    %18 = vector.load %arg5[%c0_9, %c0_10, %c0_11] : memref<1x8x256xf32, #tpu.memory_space<vmem>>, vector<1x8x256xf32>
    %19 = vector.shape_cast %18 : vector<1x8x256xf32> to vector<8x256xf32>
    %20 = vector.shape_cast %17 : vector<8x256xf32> to vector<1x8x256xf32>
    tpu.vector_store %arg5[%c0_9, %c0_10, %c0_11], %20 {strides = array<i32>} : memref<1x8x256xf32, #tpu.memory_space<vmem>>, vector<1x8x256xf32>,
    return
  }
  func.func @transform_0(%arg0: i32, %arg1: i32) -> (i32, i32) {
    %c0_i32 = arith.constant 0 : i32
    %c0_i32_0 = arith.constant 0 : i32
    %c0_i32_1 = arith.constant 0 : i32
    return %c0_i32, %c0_i32_0 : i32, i32
  }
  func.func @transform_1(%arg0: i32, %arg1: i32) -> (i32, i32) {
    %c0_i32 = arith.constant 0 : i32
    %c0_i32_0 = arith.constant 0 : i32
    %c0_i32_1 = arith.constant 0 : i32
    return %c0_i32, %c0_i32_0 : i32, i32
  }
  func.func @transform_2(%arg0: i32, %arg1: i32) -> (i32, i32, i32) {
    %c0_i32 = arith.constant 0 : i32
    %c0_i32_0 = arith.constant 0 : i32
    return %arg1, %c0_i32, %arg0 : i32, i32, i32
  }
  func.func @transform_3(%arg0: i32, %arg1: i32) -> (i32, i32, i32) {
    %c0_i32 = arith.constant 0 : i32
    %c0_i32_0 = arith.constant 0 : i32
    return %arg1, %c0_i32, %arg0 : i32, i32, i32
  }
}

</mosaic_0001>

<llo_original>
// kernel: tpu_custom_call.1
$region0: #{tpu_custom_call.1}
  #allocation0 [shape = 'u32[]', space=smem, size = 0x4, offset = 0x4, fixed_abs, tag = 'smem constant byte address 0x4 - core index']
  #allocation1 [shape = 'u32[72,128]{1,0:T(1,128)}', space=vmem, size = 0x9000, scoped, tag = 'internal scratch']
  %s0 = inlined_call_operand.vmem [shape: f32[8,4], index: 0, kind: input, shape index: {}]
  %s1 = inlined_call_operand.vmem [shape: f32[8,1], index: 1, kind: input, shape index: {}]
  %s2 = inlined_call_operand.vmem [shape: f32[2,4,256], index: 2, kind: input, shape index: {}]
  %s3 = inlined_call_operand.hbm [shape: f32[2,8,256], index: 3, kind: output, shape index: {}]
  %s4 = sld [smem:[#allocation0]]
  $region45: #{tpu_custom_call.1} parent=0
    _
  %s6 = ssub.s32 1, %s4
  %s7 = scalar_select 0, %s6, %s4
  $region1: #{tpu_custom_call.1} parent=0
    #allocation2 [shape = 'u8[16384]{0}', space=vmem, size = 0x4000, scoped, tag = 'output window, operand 0']
    #allocation3 [shape = 's32[2]{0}', space=sflag, size = 0x8, scoped, tag = 'scoped memory for tpu_custom_call.1']
    %8 = vsyncpa [#allocation3], 0
    %s9 = scalar_lea.sflag [#allocation3], 1
    %10 = vsyncpa %s9, 0
    loop: start=0, step=1, limit=4
    $region2: #{tpu_custom_call.1} parent=1 // loop_pre_header
      _
    $region3: #{tpu_custom_call.1} parent=1 // loop_header
      %s12 = sphi 0, %s16
      %p13 = scmp.ge.s32.totalorder %s12, 4
      %s19 = sphi 0, %s31
      %s20 = sphi 0, %s27
      %s21 = sphi 0, %s19
      %s22 = sphi 0, %s20
      %s23 = sphi 0, %s21
      %s24 = sphi 0, %s22
      %s32 = sphi 0, %s32
      %s34 = sphi 0, %s32
      %s35 = sphi 0, %s34
      %s49 = sphi 0, %s35
      %s53 = sphi 0, %s53
      %s55 = sphi 0, %s53
      %s56 = sphi 0, %s55
      %s70 = sphi 0, %s56
      %s78 = sphi 0, %s80
      %s81 = sphi 0, %s78
      %s82 = sphi 0, %s81
      %s98 = sphi 0, %s82
      %s106 = sphi 0, %s108
      %s109 = sphi 0, %s106
      %s110 = sphi 0, %s109
      %s126 = sphi 0, %s110
    $region4: #{tpu_custom_call.1} parent=1 // loop_header_branch
      %15 = sbr.rel (%p13) target = $region8
    $region5: #{tpu_custom_call.1} parent=1 // loop_body
      %s17 = ssub.s32 %s12, 1
      %s18 = ssub.s32 %s12, 2
      %s25 = sadd.s32 1, %s20
      %p26 = scmp.ge.s32.totalorder %s25, 2
      %s27 = scalar_select %p26, 0, %s25
      %s28 = sadd.s32 1, %s19
      %s29 = scalar_select %p26, %s28, %s19
      %p30 = scmp.ge.s32.totalorder %s29, 1
      %s31 = scalar_select %p30, 0, %s29
      %s33 = sadd.s32 %s32, 1
      %p36 = scmp.eq.s32.totalorder %s12, 1
      %p37 = scmp.ne.s32.totalorder %s32, %s34
      %p38 = scmp.eq.s32.totalorder %s12, 0
      %p39 = por %p37, %p38
      %p40 = scmp.ne.s32.totalorder %s32, %s34
      %p41 = scmp.eq.s32.totalorder %s17, 1
      %p42 = por %p40, %p41
      %p43 = scmp.ne.s32.totalorder %s34, %s35
      %p44 = scmp.eq.s32.totalorder %s17, 0
      %p45 = por %p43, %p44
      %p46 = scmp.ne.s32.totalorder %s34, %s35
      %p47 = scmp.eq.s32.totalorder %s18, 1
      %p48 = por %p46, %p47
      %p50 = scmp.ne.s32.totalorder %s35, %s49
      %p51 = scmp.eq.s32.totalorder %s18, 0
      %p52 = por %p50, %p51
      %s54 = sadd.s32 %s53, 1
      %p57 = scmp.eq.s32.totalorder %s12, 1
      %p58 = scmp.ne.s32.totalorder %s53, %s55
      %p59 = scmp.eq.s32.totalorder %s12, 0
      %p60 = por %p58, %p59
      %p61 = scmp.ne.s32.totalorder %s53, %s55
      %p62 = scmp.eq.s32.totalorder %s17, 1
      %p63 = por %p61, %p62
      %p64 = scmp.ne.s32.totalorder %s55, %s56
      %p65 = scmp.eq.s32.totalorder %s17, 0
      %p66 = por %p64, %p65
      %p67 = scmp.ne.s32.totalorder %s55, %s56
      %p68 = scmp.eq.s32.totalorder %s18, 1
      %p69 = por %p67, %p68
      %p71 = scmp.ne.s32.totalorder %s56, %s70
      %p72 = scmp.eq.s32.totalorder %s18, 0
      %p73 = por %p71, %p72
      %s74 = ssub.s32 %s20, %s27
      %s75 = ssub.s32 %s19, %s31
      %s76 = sor.u32 %s74, %s75
      %p77 = scmp.eq.s32.totalorder %s76, 0
      %s79 = sadd.s32 %s78, 1
      %s80 = scalar_select %p77, %s78, %s79
      %p83 = pneg %p77
      %p84 = scmp.eq.s32.totalorder %s12, 1
      %p85 = por %p83, %p84
      %p86 = scmp.ne.s32.totalorder %s78, %s81
      %p87 = scmp.eq.s32.totalorder %s12, 0
      %p88 = por %p86, %p87
      %p89 = scmp.ne.s32.totalorder %s78, %s81
      %p90 = scmp.eq.s32.totalorder %s17, 1
      %p91 = por %p89, %p90
      %p92 = scmp.ne.s32.totalorder %s81, %s82
      %p93 = scmp.eq.s32.totalorder %s17, 0
      %p94 = por %p92, %p93
      %p95 = scmp.ne.s32.totalorder %s81, %s82
      %p96 = scmp.eq.s32.totalorder %s18, 1
      %p97 = por %p95, %p96
      %p99 = scmp.ne.s32.totalorder %s82, %s98
      %p100 = scmp.eq.s32.totalorder %s18, 0
      %p101 = por %p99, %p100
      %s102 = ssub.s32 %s20, %s27
      %s103 = ssub.s32 %s19, %s31
      %s104 = sor.u32 %s102, %s103
      %p105 = scmp.eq.s32.totalorder %s104, 0
      %s107 = sadd.s32 %s106, 1
      %s108 = scalar_select %p105, %s106, %s107
      %p111 = pneg %p105
      %p112 = scmp.eq.s32.totalorder %s12, 1
      %p113 = por %p111, %p112
      %p114 = scmp.ne.s32.totalorder %s106, %s109
      %p115 = scmp.eq.s32.totalorder %s12, 0
      %p116 = por %p114, %p115
      %p117 = scmp.ne.s32.totalorder %s106, %s109
      %p118 = scmp.eq.s32.totalorder %s17, 1
      %p119 = por %p117, %p118
      %p120 = scmp.ne.s32.totalorder %s109, %s110
      %p121 = scmp.eq.s32.totalorder %s17, 0
      %p122 = por %p120, %p121
      %p123 = scmp.ne.s32.totalorder %s109, %s110
      %p124 = scmp.eq.s32.totalorder %s18, 1
      %p125 = por %p123, %p124
      %p127 = scmp.ne.s32.totalorder %s110, %s126
      %p128 = scmp.eq.s32.totalorder %s18, 0
      %p129 = por %p127, %p128
      %p130 = scmp.le.s32.totalorder 1, %s12
      %p131 = scmp.lt.s32.totalorder %s12, 3
      %p132 = pnand %p130, %p131
      %p133 = pneg %p132
      // Predicated region
      $region9: #{tpu_custom_call.1} parent=5 // pred_check
        _
      $region10: #{tpu_custom_call.1} parent=5 // pred_check_branch
        %135 = sbr.rel (%p132) target = $region12
      $region11: #{tpu_custom_call.1} parent=5 // pred_region
        %s136 = ssub.s32 %s12, 1
        // Predicated region
        $region13: #{tpu_custom_call.1} parent=11 // pred_check
          %p137 = pneg %p45
        $region14: #{tpu_custom_call.1} parent=11 // pred_check_branch
          %139 = sbr.rel (%p137) target = $region16
        $region15: #{tpu_custom_call.1} parent=11 // pred_region
          _
        $region16: #{tpu_custom_call.1} parent=11 // pred_fallthru
          _
        // Predicated region
        $region17: #{tpu_custom_call.1} parent=11 // pred_check
          %p140 = pneg %p66
        $region18: #{tpu_custom_call.1} parent=11 // pred_check_branch
          %142 = sbr.rel (%p140) target = $region20
        $region19: #{tpu_custom_call.1} parent=11 // pred_region
          _
        $region20: #{tpu_custom_call.1} parent=11 // pred_fallthru
          _
      $region12: #{tpu_custom_call.1} parent=5 // pred_fallthru
        _
      %p143 = scmp.lt.s32.totalorder %s12, 2
      // Predicated region
      $region21: #{tpu_custom_call.1} parent=5 // pred_check
        %p144 = pneg %p143
      $region22: #{tpu_custom_call.1} parent=5 // pred_check_branch
        %146 = sbr.rel (%p144) target = $region24
      $region23: #{tpu_custom_call.1} parent=5 // pred_region
        // Predicated region
        $region25: #{tpu_custom_call.1} parent=23 // pred_check
          %p147 = pneg %p88
        $region26: #{tpu_custom_call.1} parent=23 // pred_check_branch
          %149 = sbr.rel (%p147) target = $region28
        $region27: #{tpu_custom_call.1} parent=23 // pred_region
          %s150 = smul.u32 2, %s19
          %p151 = scmp.lt.s32.totalorder %s20, 1
          %s152 = scalar_select %p151, %s20, 1
          %p153 = scmp.lt.s32.totalorder %s150, 1
          %s154 = scalar_select %p153, %s150, 1
          %s155 = smul.addr %s152, 2
          %s156 = sadd.s32 %s154, %s155
          %s157 = smul.addr %s156, 4
          %s158 = scalar_lea.vmem %s2, %s157
          %s159 = smul.u32 2, %s19
        $region28: #{tpu_custom_call.1} parent=23 // pred_fallthru
          _
      $region24: #{tpu_custom_call.1} parent=5 // pred_fallthru
        _
      %p160 = scmp.le.s32.totalorder 1, %s12
      %p161 = scmp.lt.s32.totalorder %s12, 3
      %p162 = pnand %p160, %p161
      %p163 = pneg %p162
      // Predicated region
      $region29: #{tpu_custom_call.1} parent=5 // pred_check
        _
      $region30: #{tpu_custom_call.1} parent=5 // pred_check_branch
        %165 = sbr.rel (%p162) target = $region32
      $region31: #{tpu_custom_call.1} parent=5 // pred_region
        %s166 = ssub.s32 %s12, 1
        %p167 = pneg %p45
        %p168 = pneg %p42
        %p169 = pneg %p66
        %p170 = pneg %p63
        %s171 = smul.u32 2, %s21
        %p172 = scmp.lt.s32.totalorder %s22, 1
        %s173 = scalar_select %p172, %s22, 1
        %p174 = scmp.lt.s32.totalorder %s171, 1
        %s175 = scalar_select %p174, %s171, 1
        %s176 = smul.addr %s173, 2
        %s177 = sadd.s32 %s175, %s176
        %s178 = smul.addr %s177, 4
        %s179 = scalar_lea.vmem %s2, %s178
        %p180 = pneg %p94
        %p181 = pneg %p91
        %p182 = pneg %p122
        %p183 = pneg %p119
        %s184 = sand.u32 %s109, 1
        %s185 = scalar_lea.sflag [#allocation3], %s184
        %s186 = sand.u32 %s109, 1
        %s187 = smul.addr %s186, 16
        %s188 = scalar_lea.vmem [#allocation2], %s187
        %s189 = smul.u32 2, %s21
        %p190 = scmp.lt.s32.totalorder %s22, 1
        %s191 = scalar_select %p190, %s22, 1
        %p192 = scmp.lt.s32.totalorder %s189, 1
        %s193 = scalar_select %p192, %s189, 1
        %s194 = smul.addr %s191, 2
        %s195 = sadd.s32 %s193, %s194
        %s196 = smul.addr %s195, 4
        %s197 = scalar_lea.vmem %s2, %s196
        %s198 = smul.u32 2, %s21
        %s199 = smul.u32 2, %s21
        %v200 = vld [vmem:[%s0] sm:$0xff]
        %v201 = vld [vmem:[%s197] sm:$0xff]
        %v202 = vld [vmem:[%s1] sm:$0xff]
        %204 = vset.pattern.permute.xlu0 0
        %205 = vperm.xlu0 %204, %v202
        %v206 = vpop.permute.xlu0 %205
        %209 = vst [vmem:[#allocation1] ss:$2 sm:$0xff] %v201
        %v210 = vld.sshfl [vmem:[#allocation1] sm:$0xff pattern:$0x75316420]
        %v211 = vld.sshfl [vmem:[#allocation1 + $0x8] sm:$0xff pattern:$0x75316420]
        %vm212 = vcmask 31744
        %v214 = vsel %vm212, %v200, 0
        %vm216 = vcmask 1043456
        %v217 = vsel %vm216, %v210, 0
        %v219 = vsel %vm216, %v211, 0
        %221 = vmatpush.msra.mxu0 0.0
        %222 = vmatpush.msra.mxu0 0.0
        %223 = vmatpush.msra.mxu0 0.0
        %224 = vmatpush.msra.mxu0 0.0
        %225 = vmatpush.msra.mxu0 0.0
        %226 = vmatpush.msra.mxu0 0.0
        %227 = vmatpush.msra.mxu0 0.0
        %228 = vmatpush.msra.mxu0 0.0
        %229 = vmatpush.msra.mxu0 0.0
        %230 = vmatpush.msra.mxu0 0.0
        %231 = vmatpush.msra.mxu0 0.0
        %232 = vmatpush.msra.mxu0 0.0
        %233 = vmatpush.msra.mxu0 0.0
        %234 = vmatpush.msra.mxu0 0.0
        %235 = vmatpush.msra.mxu0 0.0
        %236 = vmatpush.msra.mxu0 %v217
        %237 = vmatmul.f32.gmra.mxu0 %v214
        %v238 = vpop.f32.mrf.mxu0
        %v239 = vadd.f32 %v206, %v238
        %240 = vdwg.mxu0
        %241 = vmatpush.msra.mxu0 0.0
        %242 = vmatpush.msra.mxu0 0.0
        %243 = vmatpush.msra.mxu0 0.0
        %244 = vmatpush.msra.mxu0 0.0
        %245 = vmatpush.msra.mxu0 0.0
        %246 = vmatpush.msra.mxu0 0.0
        %247 = vmatpush.msra.mxu0 0.0
        %248 = vmatpush.msra.mxu0 0.0
        %249 = vmatpush.msra.mxu0 0.0
        %250 = vmatpush.msra.mxu0 0.0
        %251 = vmatpush.msra.mxu0 0.0
        %252 = vmatpush.msra.mxu0 0.0
        %253 = vmatpush.msra.mxu0 0.0
        %254 = vmatpush.msra.mxu0 0.0
        %255 = vmatpush.msra.mxu0 0.0
        %256 = vmatpush.msra.mxu0 %v219
        %257 = vmatmul.f32.gmra.mxu0 %v214
        %v258 = vpop.f32.mrf.mxu0
        %v259 = vadd.f32 %v206, %v258
        %260 = vdwg.mxu0
        %v261 = vsub.f32 0.0, %v239
        %v262 = vsub.f32 0.0, %v259
        %v263 = vmul.f32 %v261, 1.442695
        %v264 = vpow.pop %v263
        %v265 = vmul.f32 %v262, 1.442695
        %v266 = vpow.pop %v265
        %v267 = vadd.f32 %v264, 1.0
        %v268 = vadd.f32 %v266, 1.0
        %v269 = vrcp.pop %v267
        %v270 = vrcp.pop %v268
        %v271 = vmul.f32 %v267, %v269
        %v272 = vmul.f32 %v268, %v270
        %v273 = vsub.f32 2.0, %v271
        %v274 = vsub.f32 2.0, %v272
        %v275 = vmul.f32 %v269, %v273
        %v276 = vmul.f32 %v270, %v274
        %v277 = vmul.f32 %v239, %v275
        %v278 = vmul.f32 %v259, %v276
        %279 = vst [vmem:[%s188] sm:$0xff] %v277
        %280 = vst [vmem:[%s188 + $0x8] sm:$0xff] %v278
        %s281 = sand.u32 %s109, 1
        %s282 = scalar_lea.sflag [#allocation3], %s281
        %s283 = sand.u32 %s109, 1
        %s284 = smul.addr %s283, 16
        %s285 = scalar_lea.vmem [#allocation2], %s284
        // Predicated region
        $region33: #{tpu_custom_call.1} parent=31 // pred_check
          %p286 = pneg %p119
        $region34: #{tpu_custom_call.1} parent=31 // pred_check_branch
          %288 = sbr.rel (%p286) target = $region36
        $region35: #{tpu_custom_call.1} parent=31 // pred_region
          %s289 = smul.u32 2, %s21
          %291 = vsyncadd %s282, 0
          %s292 = smul.addr %s22, 2
          %s293 = sadd.s32 %s289, %s292
          %s294 = smul.addr %s293, 8
          %s295 = scalar_lea.hbm %s3, %s294
          %s297 = sshll.u32 %s285, 4
          %s298 = int_to_ptr.vmem [resolvable:$true] %s297
          %s299 = sshll.u32 %s295, 4
          %s300 = int_to_ptr.hbm [resolvable:$true] %s299
          %302 = dma.vmem_to_hbm [thread:$0]  %s298, 256, %s300, %s282
        $region36: #{tpu_custom_call.1} parent=31 // pred_fallthru
          _
      $region32: #{tpu_custom_call.1} parent=5 // pred_fallthru
        _
      %p303 = scmp.le.s32.totalorder 2, %s12
      // Predicated region
      $region37: #{tpu_custom_call.1} parent=5 // pred_check
        %p304 = pneg %p303
      $region38: #{tpu_custom_call.1} parent=5 // pred_check_branch
        %306 = sbr.rel (%p304) target = $region40
      $region39: #{tpu_custom_call.1} parent=5 // pred_region
        %s307 = ssub.s32 %s12, 2
        // Predicated region
        $region41: #{tpu_custom_call.1} parent=39 // pred_check
          %p308 = pneg %p125
        $region42: #{tpu_custom_call.1} parent=39 // pred_check_branch
          %310 = sbr.rel (%p308) target = $region44
        $region43: #{tpu_custom_call.1} parent=39 // pred_region
          %s311 = sand.u32 %s110, 1
          %s312 = scalar_lea.sflag [#allocation3], %s311
          %s313 = sand.u32 %s110, 1
          %s314 = smul.addr %s313, 16
          %s315 = scalar_lea.vmem [#allocation2], %s314
          %317 = dma.done %s312, 256
        $region44: #{tpu_custom_call.1} parent=39 // pred_fallthru
          _
      $region40: #{tpu_custom_call.1} parent=5 // pred_fallthru
        _
    $region6: #{tpu_custom_call.1} parent=1 // loop_footer
      %s16 = sadd.s32 1, %s12
    $region7: #{tpu_custom_call.1} parent=1 // loop_footer_branch
      %11 = sbr.rel target = $region3
    $region8: #{tpu_custom_call.1} parent=1 // loop_exit
      _
    %318 = vsyncpa [#allocation3], 1
    %s319 = scalar_lea.sflag [#allocation3], 1
    %320 = vsyncpa %s319, 1

// kernel: tpu_custom_call.1
$region0: #{tpu_custom_call.1}
  #allocation0 [shape = 'u32[]', space=smem, size = 0x4, offset = 0x4, fixed_abs, tag = 'smem constant byte address 0x4 - core index']
  #allocation1 [shape = 'u32[72,128]{1,0:T(1,128)}', space=vmem, size = 0x9000, scoped, tag = 'internal scratch']
  %s0 = inlined_call_operand.vmem [shape: f32[8,4], index: 0, kind: input, shape index: {}]
  %s1 = inlined_call_operand.vmem [shape: f32[8,1], index: 1, kind: input, shape index: {}]
  %s2 = inlined_call_operand.vmem [shape: f32[2,4,256], index: 2, kind: input, shape index: {}]
  %s3 = inlined_call_operand.hbm [shape: f32[2,8,256], index: 3, kind: output, shape index: {}]
  %s4 = sld [smem:[#allocation0]]
  $region45: #{tpu_custom_call.1} parent=0
    _
  %s6 = ssub.s32 1, %s4
  %s7 = scalar_select 0, %s6, %s4
  $region1: #{tpu_custom_call.1} parent=0
    #allocation2 [shape = 'u8[16384]{0}', space=vmem, size = 0x4000, scoped, tag = 'output window, operand 0']
    #allocation3 [shape = 's32[2]{0}', space=sflag, size = 0x8, scoped, tag = 'scoped memory for tpu_custom_call.1']
    %8 = vsyncpa [#allocation3], 0
    %s9 = scalar_lea.sflag [#allocation3], 1
    %10 = vsyncpa %s9, 0
    loop: start=0, step=1, limit=4
    $region2: #{tpu_custom_call.1} parent=1 // loop_pre_header
      _
    $region3: #{tpu_custom_call.1} parent=1 // loop_header
      %s12 = sphi 0, %s16
      %p13 = scmp.ge.s32.totalorder %s12, 4
      %s19 = sphi 0, %s31
      %s20 = sphi 0, %s27
      %s21 = sphi 0, %s19
      %s22 = sphi 0, %s20
      %s23 = sphi 0, %s21
      %s24 = sphi 0, %s22
      %s32 = sphi 0, %s32
      %s34 = sphi 0, %s32
      %s35 = sphi 0, %s34
      %s49 = sphi 0, %s35
      %s53 = sphi 0, %s53
      %s55 = sphi 0, %s53
      %s56 = sphi 0, %s55
      %s70 = sphi 0, %s56
      %s78 = sphi 0, %s80
      %s81 = sphi 0, %s78
      %s82 = sphi 0, %s81
      %s98 = sphi 0, %s82
      %s106 = sphi 0, %s108
      %s109 = sphi 0, %s106
      %s110 = sphi 0, %s109
      %s126 = sphi 0, %s110
    $region4: #{tpu_custom_call.1} parent=1 // loop_header_branch
      %15 = sbr.rel (%p13) target = $region8
    $region5: #{tpu_custom_call.1} parent=1 // loop_body
      %s17 = ssub.s32 %s12, 1
      %s18 = ssub.s32 %s12, 2
      %s25 = sadd.s32 1, %s20
      %p26 = scmp.ge.s32.totalorder %s25, 2
      %s27 = scalar_select %p26, 0, %s25
      %s28 = sadd.s32 1, %s19
      %s29 = scalar_select %p26, %s28, %s19
      %p30 = scmp.ge.s32.totalorder %s29, 1
      %s31 = scalar_select %p30, 0, %s29
      %s33 = sadd.s32 %s32, 1
      %p36 = scmp.eq.s32.totalorder %s12, 1
      %p37 = scmp.ne.s32.totalorder %s32, %s34
      %p38 = scmp.eq.s32.totalorder %s12, 0
      %p39 = por %p37, %p38
      %p40 = scmp.ne.s32.totalorder %s32, %s34
      %p41 = scmp.eq.s32.totalorder %s17, 1
      %p42 = por %p40, %p41
      %p43 = scmp.ne.s32.totalorder %s34, %s35
      %p44 = scmp.eq.s32.totalorder %s17, 0
      %p45 = por %p43, %p44
      %p46 = scmp.ne.s32.totalorder %s34, %s35
      %p47 = scmp.eq.s32.totalorder %s18, 1
      %p48 = por %p46, %p47
      %p50 = scmp.ne.s32.totalorder %s35, %s49
      %p51 = scmp.eq.s32.totalorder %s18, 0
      %p52 = por %p50, %p51
      %s54 = sadd.s32 %s53, 1
      %p57 = scmp.eq.s32.totalorder %s12, 1
      %p58 = scmp.ne.s32.totalorder %s53, %s55
      %p59 = scmp.eq.s32.totalorder %s12, 0
      %p60 = por %p58, %p59
      %p61 = scmp.ne.s32.totalorder %s53, %s55
      %p62 = scmp.eq.s32.totalorder %s17, 1
      %p63 = por %p61, %p62
      %p64 = scmp.ne.s32.totalorder %s55, %s56
      %p65 = scmp.eq.s32.totalorder %s17, 0
      %p66 = por %p64, %p65
      %p67 = scmp.ne.s32.totalorder %s55, %s56
      %p68 = scmp.eq.s32.totalorder %s18, 1
      %p69 = por %p67, %p68
      %p71 = scmp.ne.s32.totalorder %s56, %s70
      %p72 = scmp.eq.s32.totalorder %s18, 0
      %p73 = por %p71, %p72
      %s74 = ssub.s32 %s20, %s27
      %s75 = ssub.s32 %s19, %s31
      %s76 = sor.u32 %s74, %s75
      %p77 = scmp.eq.s32.totalorder %s76, 0
      %s79 = sadd.s32 %s78, 1
      %s80 = scalar_select %p77, %s78, %s79
      %p83 = pneg %p77
      %p84 = scmp.eq.s32.totalorder %s12, 1
      %p85 = por %p83, %p84
      %p86 = scmp.ne.s32.totalorder %s78, %s81
      %p87 = scmp.eq.s32.totalorder %s12, 0
      %p88 = por %p86, %p87
      %p89 = scmp.ne.s32.totalorder %s78, %s81
      %p90 = scmp.eq.s32.totalorder %s17, 1
      %p91 = por %p89, %p90
      %p92 = scmp.ne.s32.totalorder %s81, %s82
      %p93 = scmp.eq.s32.totalorder %s17, 0
      %p94 = por %p92, %p93
      %p95 = scmp.ne.s32.totalorder %s81, %s82
      %p96 = scmp.eq.s32.totalorder %s18, 1
      %p97 = por %p95, %p96
      %p99 = scmp.ne.s32.totalorder %s82, %s98
      %p100 = scmp.eq.s32.totalorder %s18, 0
      %p101 = por %p99, %p100
      %s102 = ssub.s32 %s20, %s27
      %s103 = ssub.s32 %s19, %s31
      %s104 = sor.u32 %s102, %s103
      %p105 = scmp.eq.s32.totalorder %s104, 0
      %s107 = sadd.s32 %s106, 1
      %s108 = scalar_select %p105, %s106, %s107
      %p111 = pneg %p105
      %p112 = scmp.eq.s32.totalorder %s12, 1
      %p113 = por %p111, %p112
      %p114 = scmp.ne.s32.totalorder %s106, %s109
      %p115 = scmp.eq.s32.totalorder %s12, 0
      %p116 = por %p114, %p115
      %p117 = scmp.ne.s32.totalorder %s106, %s109
      %p118 = scmp.eq.s32.totalorder %s17, 1
      %p119 = por %p117, %p118
      %p120 = scmp.ne.s32.totalorder %s109, %s110
      %p121 = scmp.eq.s32.totalorder %s17, 0
      %p122 = por %p120, %p121
      %p123 = scmp.ne.s32.totalorder %s109, %s110
      %p124 = scmp.eq.s32.totalorder %s18, 1
      %p125 = por %p123, %p124
      %p127 = scmp.ne.s32.totalorder %s110, %s126
      %p128 = scmp.eq.s32.totalorder %s18, 0
      %p129 = por %p127, %p128
      %p130 = scmp.le.s32.totalorder 1, %s12
      %p131 = scmp.lt.s32.totalorder %s12, 3
      %p132 = pnand %p130, %p131
      %p133 = pneg %p132
      // Predicated region
      $region9: #{tpu_custom_call.1} parent=5 // pred_check
        _
      $region10: #{tpu_custom_call.1} parent=5 // pred_check_branch
        %135 = sbr.rel (%p132) target = $region12
      $region11: #{tpu_custom_call.1} parent=5 // pred_region
        %s136 = ssub.s32 %s12, 1
        // Predicated region
        $region13: #{tpu_custom_call.1} parent=11 // pred_check
          %p137 = pneg %p45
        $region14: #{tpu_custom_call.1} parent=11 // pred_check_branch
          %139 = sbr.rel (%p137) target = $region16
        $region15: #{tpu_custom_call.1} parent=11 // pred_region
          _
        $region16: #{tpu_custom_call.1} parent=11 // pred_fallthru
          _
        // Predicated region
        $region17: #{tpu_custom_call.1} parent=11 // pred_check
          %p140 = pneg %p66
        $region18: #{tpu_custom_call.1} parent=11 // pred_check_branch
          %142 = sbr.rel (%p140) target = $region20
        $region19: #{tpu_custom_call.1} parent=11 // pred_region
          _
        $region20: #{tpu_custom_call.1} parent=11 // pred_fallthru
          _
      $region12: #{tpu_custom_call.1} parent=5 // pred_fallthru
        _
      %p143 = scmp.lt.s32.totalorder %s12, 2
      // Predicated region
      $region21: #{tpu_custom_call.1} parent=5 // pred_check
        %p144 = pneg %p143
      $region22: #{tpu_custom_call.1} parent=5 // pred_check_branch
        %146 = sbr.rel (%p144) target = $region24
      $region23: #{tpu_custom_call.1} parent=5 // pred_region
        // Predicated region
        $region25: #{tpu_custom_call.1} parent=23 // pred_check
          %p147 = pneg %p88
        $region26: #{tpu_custom_call.1} parent=23 // pred_check_branch
          %149 = sbr.rel (%p147) target = $region28
        $region27: #{tpu_custom_call.1} parent=23 // pred_region
          %s150 = smul.u32 2, %s19
          %p151 = scmp.lt.s32.totalorder %s20, 1
          %s152 = scalar_select %p151, %s20, 1
          %p153 = scmp.lt.s32.totalorder %s150, 1
          %s154 = scalar_select %p153, %s150, 1
          %s155 = smul.addr %s152, 2
          %s156 = sadd.s32 %s154, %s155
          %s157 = smul.addr %s156, 4
          %s158 = scalar_lea.vmem %s2, %s157
          %s159 = smul.u32 2, %s19
        $region28: #{tpu_custom_call.1} parent=23 // pred_fallthru
          _
      $region24: #{tpu_custom_call.1} parent=5 // pred_fallthru
        _
      %p160 = scmp.le.s32.totalorder 1, %s12
      %p161 = scmp.lt.s32.totalorder %s12, 3
      %p162 = pnand %p160, %p161
      %p163 = pneg %p162
      // Predicated region
      $region29: #{tpu_custom_call.1} parent=5 // pred_check
        _
      $region30: #{tpu_custom_call.1} parent=5 // pred_check_branch
        %165 = sbr.rel (%p162) target = $region32
      $region31: #{tpu_custom_call.1} parent=5 // pred_region
        %s166 = ssub.s32 %s12, 1
        %p167 = pneg %p45
        %p168 = pneg %p42
        %p169 = pneg %p66
        %p170 = pneg %p63
        %s171 = smul.u32 2, %s21
        %p172 = scmp.lt.s32.totalorder %s22, 1
        %s173 = scalar_select %p172, %s22, 1
        %p174 = scmp.lt.s32.totalorder %s171, 1
        %s175 = scalar_select %p174, %s171, 1
        %s176 = smul.addr %s173, 2
        %s177 = sadd.s32 %s175, %s176
        %s178 = smul.addr %s177, 4
        %s179 = scalar_lea.vmem %s2, %s178
        %p180 = pneg %p94
        %p181 = pneg %p91
        %p182 = pneg %p122
        %p183 = pneg %p119
        %s184 = sand.u32 %s109, 1
        %s185 = scalar_lea.sflag [#allocation3], %s184
        %s186 = sand.u32 %s109, 1
        %s187 = smul.addr %s186, 16
        %s188 = scalar_lea.vmem [#allocation2], %s187
        %s189 = smul.u32 2, %s21
        %p190 = scmp.lt.s32.totalorder %s22, 1
        %s191 = scalar_select %p190, %s22, 1
        %p192 = scmp.lt.s32.totalorder %s189, 1
        %s193 = scalar_select %p192, %s189, 1
        %s194 = smul.addr %s191, 2
        %s195 = sadd.s32 %s193, %s194
        %s196 = smul.addr %s195, 4
        %s197 = scalar_lea.vmem %s2, %s196
        %s198 = smul.u32 2, %s21
        %s199 = smul.u32 2, %s21
        %v200 = vld [vmem:[%s0] sm:$0xff]
        %v201 = vld [vmem:[%s197] sm:$0xff]
        %v202 = vld [vmem:[%s1] sm:$0xff]
        %204 = vset.pattern.permute.xlu0 0
        %205 = vperm.xlu0 %204, %v202
        %v206 = vpop.permute.xlu0 %205
        %209 = vst [vmem:[#allocation1] ss:$2 sm:$0xff] %v201
        %v210 = vld.sshfl [vmem:[#allocation1] sm:$0xff pattern:$0x75316420]
        %v211 = vld.sshfl [vmem:[#allocation1 + $0x8] sm:$0xff pattern:$0x75316420]
        %vm212 = vcmask 31744
        %v214 = vsel %vm212, %v200, 0
        %vm216 = vcmask 1043456
        %v217 = vsel %vm216, %v210, 0
        %v219 = vsel %vm216, %v211, 0
        %221 = vmatpush.msra.mxu0 0.0
        %222 = vmatpush.msra.mxu0 0.0
        %223 = vmatpush.msra.mxu0 0.0
        %224 = vmatpush.msra.mxu0 0.0
        %225 = vmatpush.msra.mxu0 0.0
        %226 = vmatpush.msra.mxu0 0.0
        %227 = vmatpush.msra.mxu0 0.0
        %228 = vmatpush.msra.mxu0 0.0
        %229 = vmatpush.msra.mxu0 0.0
        %230 = vmatpush.msra.mxu0 0.0
        %231 = vmatpush.msra.mxu0 0.0
        %232 = vmatpush.msra.mxu0 0.0
        %233 = vmatpush.msra.mxu0 0.0
        %234 = vmatpush.msra.mxu0 0.0
        %235 = vmatpush.msra.mxu0 0.0
        %236 = vmatpush.msra.mxu0 %v217
        %237 = vmatmul.f32.gmra.mxu0 %v214
        %v238 = vpop.f32.mrf.mxu0
        %v239 = vadd.f32 %v206, %v238
        %240 = vdwg.mxu0
        %241 = vmatpush.msra.mxu0 0.0
        %242 = vmatpush.msra.mxu0 0.0
        %243 = vmatpush.msra.mxu0 0.0
        %244 = vmatpush.msra.mxu0 0.0
        %245 = vmatpush.msra.mxu0 0.0
        %246 = vmatpush.msra.mxu0 0.0
        %247 = vmatpush.msra.mxu0 0.0
        %248 = vmatpush.msra.mxu0 0.0
        %249 = vmatpush.msra.mxu0 0.0
        %250 = vmatpush.msra.mxu0 0.0
        %251 = vmatpush.msra.mxu0 0.0
        %252 = vmatpush.msra.mxu0 0.0
        %253 = vmatpush.msra.mxu0 0.0
        %254 = vmatpush.msra.mxu0 0.0
        %255 = vmatpush.msra.mxu0 0.0
        %256 = vmatpush.msra.mxu0 %v219
        %257 = vmatmul.f32.gmra.mxu0 %v214
        %v258 = vpop.f32.mrf.mxu0
        %v259 = vadd.f32 %v206, %v258
        %260 = vdwg.mxu0
        %v261 = vsub.f32 0.0, %v239
        %v262 = vsub.f32 0.0, %v259
        %v263 = vmul.f32 %v261, 1.442695
        %v264 = vpow.pop %v263
        %v265 = vmul.f32 %v262, 1.442695
        %v266 = vpow.pop %v265
        %v267 = vadd.f32 %v264, 1.0
        %v268 = vadd.f32 %v266, 1.0
        %v269 = vrcp.pop %v267
        %v270 = vrcp.pop %v268
        %v271 = vmul.f32 %v267, %v269
        %v272 = vmul.f32 %v268, %v270
        %v273 = vsub.f32 2.0, %v271
        %v274 = vsub.f32 2.0, %v272
        %v275 = vmul.f32 %v269, %v273
        %v276 = vmul.f32 %v270, %v274
        %v277 = vmul.f32 %v239, %v275
        %v278 = vmul.f32 %v259, %v276
        %279 = vst [vmem:[%s188] sm:$0xff] %v277
        %280 = vst [vmem:[%s188 + $0x8] sm:$0xff] %v278
        %s281 = sand.u32 %s109, 1
        %s282 = scalar_lea.sflag [#allocation3], %s281
        %s283 = sand.u32 %s109, 1
        %s284 = smul.addr %s283, 16
        %s285 = scalar_lea.vmem [#allocation2], %s284
        // Predicated region
        $region33: #{tpu_custom_call.1} parent=31 // pred_check
          %p286 = pneg %p119
        $region34: #{tpu_custom_call.1} parent=31 // pred_check_branch
          %288 = sbr.rel (%p286) target = $region36
        $region35: #{tpu_custom_call.1} parent=31 // pred_region
          %s289 = smul.u32 2, %s21
          %291 = vsyncadd %s282, 0
          %s292 = smul.addr %s22, 2
          %s293 = sadd.s32 %s289, %s292
          %s294 = smul.addr %s293, 8
          %s295 = scalar_lea.hbm %s3, %s294
          %s297 = sshll.u32 %s285, 4
          %s298 = int_to_ptr.vmem [resolvable:$true] %s297
          %s299 = sshll.u32 %s295, 4
          %s300 = int_to_ptr.hbm [resolvable:$true] %s299
          %302 = dma.vmem_to_hbm [thread:$0]  %s298, 256, %s300, %s282
        $region36: #{tpu_custom_call.1} parent=31 // pred_fallthru
          _
      $region32: #{tpu_custom_call.1} parent=5 // pred_fallthru
        _
      %p303 = scmp.le.s32.totalorder 2, %s12
      // Predicated region
      $region37: #{tpu_custom_call.1} parent=5 // pred_check
        %p304 = pneg %p303
      $region38: #{tpu_custom_call.1} parent=5 // pred_check_branch
        %306 = sbr.rel (%p304) target = $region40
      $region39: #{tpu_custom_call.1} parent=5 // pred_region
        %s307 = ssub.s32 %s12, 2
        // Predicated region
        $region41: #{tpu_custom_call.1} parent=39 // pred_check
          %p308 = pneg %p125
        $region42: #{tpu_custom_call.1} parent=39 // pred_check_branch
          %310 = sbr.rel (%p308) target = $region44
        $region43: #{tpu_custom_call.1} parent=39 // pred_region
          %s311 = sand.u32 %s110, 1
          %s312 = scalar_lea.sflag [#allocation3], %s311
          %s313 = sand.u32 %s110, 1
          %s314 = smul.addr %s313, 16
          %s315 = scalar_lea.vmem [#allocation2], %s314
          %317 = dma.done %s312, 256
        $region44: #{tpu_custom_call.1} parent=39 // pred_fallthru
          _
      $region40: #{tpu_custom_call.1} parent=5 // pred_fallthru
        _
    $region6: #{tpu_custom_call.1} parent=1 // loop_footer
      %s16 = sadd.s32 1, %s12
    $region7: #{tpu_custom_call.1} parent=1 // loop_footer_branch
      %11 = sbr.rel target = $region3
    $region8: #{tpu_custom_call.1} parent=1 // loop_exit
      _
    %318 = vsyncpa [#allocation3], 1
    %s319 = scalar_lea.sflag [#allocation3], 1
    %320 = vsyncpa %s319, 1

</llo_original>
